<compile_context>
chip_gen: v7x
topology: tpu7x:2x2x1
jax: 0.10.0
libtpu: 0.0.40
codegen_flags: <defaults>
</compile_context>

<pallas_src>
import functools
import math

import numpy as np

import jax
import jax.numpy as jnp
from jax.experimental import pallas as pl
from jax.experimental.pallas import tpu as pltpu


# ----------------------------- Pallas kernel ------------------------------ #

def _gf_ln_kernel(x_ref, fr_ref, fi_ref, wre_ref, wim_ref,
                  grr_ref, gir_ref, g_ref, b_ref, o_ref,
                  yr_ref, yi_ref, *, B, C):
    """Fused GlobalFilter + LayerNorm.

    x_ref:   (B*C, P)   activations, row = b*C + c            (resident, matmul dtype)
    fr/fi:   (P, Kp)    forward rfft2 real/imag matrices      (resident, matmul dtype)
    wre/wim: (B*C, Kp)  per-row frequency weights             (resident, f32)
    grr/gir: (Kp, tp)   inverse irfft2 matrices, p-tile slice (streamed, matmul dtype)
    g/b:     (1, C, 1)  LayerNorm affine                      (resident, f32)
    o_ref:   (B, C, tp) output tile (f32)
    yr/yi:   (B*C, Kp)  VMEM scratch: weighted frequency-domain activations
    """
    # ---- Stage 1 (once): forward real-DFT + per-channel complex weight ---- #
    @pl.when(pl.program_id(0) == 0)
    def _():
        x = x_ref[...]
        xr = jnp.dot(x, fr_ref[...], preferred_element_type=jnp.float32)   # (BC, Kp) f32
        xi = jnp.dot(x, fi_ref[...], preferred_element_type=jnp.float32)
        wre = wre_ref[...]
        wim = wim_ref[...]
        yr_ref[...] = (xr * wre - xi * wim).astype(yr_ref.dtype)
        yi_ref[...] = (xr * wim + xi * wre).astype(yi_ref.dtype)

    # ---- Stage 2 (every p-tile): inverse real-DFT + fused LayerNorm ---- #
    y = (jnp.dot(yr_ref[...], grr_ref[...], preferred_element_type=jnp.float32)
         + jnp.dot(yi_ref[...], gir_ref[...], preferred_element_type=jnp.float32))
    tp = y.shape[-1]
    # Free leading-dim split: rows are b-major/c-minor, so (B*C, tp) -> (B, C, tp) keeps
    # the dense (C, tp) vreg layout; the LN group is the c axis at fixed (b, p).
    y3 = y.reshape(B, C, tp)
    # One-pass statistics (biased variance, eps = 1e-5, as in nn.LayerNorm).
    mean = jnp.mean(y3, axis=1, keepdims=True)                 # (B, 1, tp)
    var = jnp.mean(y3 * y3, axis=1, keepdims=True) - mean * mean
    inv = jax.lax.rsqrt(var + 1e-5)
    o_ref[...] = ((y3 - mean) * inv * g_ref[...] + b_ref[...]).astype(o_ref.dtype)


# ------------------------ parameter / operator setup ----------------------- #

def build_dft_factorization(complex_weight, a, b, dim, *, k_align=128):
    """Shared real-DFT matrices + per-channel frequency weights (setup only).

    Row-vector convention for a flattened (a, b) plane x (length P = a*b):
        rfft2(x)  ==  x @ Fr  +  i * (x @ Fi)          Fr, Fi: (P, Kp)
        irfft2(Yr + i*Yi)  ==  Yr @ Grr + Yi @ Gir     Grr, Gir: (Kp, P)
    The frequency axis K = a*(b//2+1) is zero-padded to Kp (multiple of k_align) so the
    MXU columns / lanes stay dense; padded bins carry zero weight and zero inverse rows.
    """
    cw = np.asarray(complex_weight, dtype=np.float64)
    h, w = a, b // 2 + 1
    assert cw.shape == (h, w, dim, 2)
    P = a * b
    K = h * w
    Kp = ((K + k_align - 1) // k_align) * k_align

    # Forward rfft2 as two real matrices (built by pushing the basis through the FFT).
    basis = np.eye(P, dtype=np.float64).reshape(P, a, b)
    F = np.fft.rfft2(basis, axes=(1, 2), norm="ortho").reshape(P, K)
    Fr = np.zeros((P, Kp)); Fr[:, :K] = F.real
    Fi = np.zeros((P, Kp)); Fi[:, :K] = F.imag

    # Inverse irfft2 as two real matrices (irfft2 is real-linear in (Re, Im)).
    eyeK = np.eye(K, dtype=np.float64).reshape(K, h, w)
    Grr_ = np.fft.irfft2(eyeK, s=(a, b), axes=(1, 2), norm="ortho").reshape(K, P)
    Gir_ = np.fft.irfft2(1j * eyeK, s=(a, b), axes=(1, 2), norm="ortho").reshape(K, P)
    Grr = np.zeros((Kp, P)); Grr[:K] = Grr_
    Gir = np.zeros((Kp, P)); Gir[:K] = Gir_

    # Per-channel frequency weights, flattened over (h, w), zero-padded to Kp.
    Wre = np.zeros((dim, Kp)); Wre[:, :K] = np.transpose(cw[..., 0], (2, 0, 1)).reshape(dim, K)
    Wim = np.zeros((dim, Kp)); Wim[:, :K] = np.transpose(cw[..., 1], (2, 0, 1)).reshape(dim, K)

    to = lambda m: jnp.asarray(m, dtype=jnp.float32)
    return to(Fr), to(Fi), to(Grr), to(Gir), to(Wre), to(Wim)


def _pick_vmem_limit():
    """Generation-aware VMEM limit: ~75% of physical (96 MiB on v5e/v6e, 48 MiB on v7x)."""
    cap = 64 * 1024 * 1024  # conservative fallback (v7x physical per-core)
    try:
        cap = int(pltpu.get_tpu_info().vmem_capacity_bytes)
    except Exception:
        pass
    return int(min(max(int(cap * 0.75), 32 * 1024 * 1024), 112 * 1024 * 1024))


# ----------------------------- wrapper / glue ------------------------------ #

def block_forward(x, dft_ops, gamma, beta, *, matmul_dtype=jnp.bfloat16, tp=None):
    """Pallas implementation of Block.forward(x) for NCHW x.

    x: (B, C, H, W) f32;  dft_ops: output of build_dft_factorization;  gamma/beta: (dim,).
    matmul_dtype: dtype of MXU operands (bf16 default; f32 supported). Accumulation and
    the LayerNorm epilogue are always f32.
    """
    Fr, Fi, Grr, Gir, Wre, Wim = dft_ops
    B, C, H, W = x.shape
    dim = gamma.shape[0]
    P = H * W
    Kp = Fr.shape[1]
    assert W == dim, "nn.LayerNorm(dim) on NCHW normalizes the last axis => W == dim"
    assert C == dim, "complex_weight's dim axis multiplies the view's last axis => C == dim"
    assert Fr.shape == (P, Kp) and Grr.shape == (Kp, P)

    BC = B * C
    # NCHW -> the torch .view(B, a, b, C) flat layout -> rows (b-major, c-minor) x columns q.
    x2 = jnp.transpose(x.reshape(B, P, C), (0, 2, 1)).reshape(BC, P).astype(matmul_dtype)

    if tp is None:
        tp = next((t for t in (512, 256, 128) if P % t == 0), P)
    assert P % tp == 0
    grid = (P // tp,)

    # Pre-broadcast per-channel params to the row / epilogue layouts (tiny, loaded once).
    wre_rows = jnp.tile(Wre, (B, 1))                         # (BC, Kp) f32, row b*C+c -> c
    wim_rows = jnp.tile(Wim, (B, 1))
    g3 = gamma.reshape(1, C, 1).astype(jnp.float32)
    b3 = beta.reshape(1, C, 1).astype(jnp.float32)
    frm, fim = Fr.astype(matmul_dtype), Fi.astype(matmul_dtype)
    grm, gim = Grr.astype(matmul_dtype), Gir.astype(matmul_dtype)

    itemsize = jnp.dtype(matmul_dtype).itemsize
    cost = pl.CostEstimate(
        flops=int(8 * BC * P * Kp),                 # 2 forward + 2 inverse matmuls
        transcendentals=int(B * P),                 # one rsqrt per LN group
        bytes_accessed=int(BC * P * itemsize        # activations
                           + 4 * P * Kp * itemsize  # Fr, Fi, Grr, Gir (dominant)
                           + 2 * BC * Kp * 4        # frequency weights
                           + BC * P * 4),           # output
    )

    kernel = functools.partial(_gf_ln_kernel, B=B, C=C)

    out3 = pl.pallas_call(
        kernel,
        out_shape=jax.ShapeDtypeStruct((B, C, P), jnp.float32),
        grid=grid,
        in_specs=[
            # Resident inputs (constant block index => DMA'd once).  At real sizes these
            # could be single-buffered (pipeline_mode=pl.Buffered(1)) to free VMEM.
            pl.BlockSpec((BC, P), lambda j: (0, 0)),      # x rows
            pl.BlockSpec((P, Kp), lambda j: (0, 0)),      # Fr
            pl.BlockSpec((P, Kp), lambda j: (0, 0)),      # Fi
            pl.BlockSpec((BC, Kp), lambda j: (0, 0)),     # Wre rows
            pl.BlockSpec((BC, Kp), lambda j: (0, 0)),     # Wim rows
            # Streamed inverse-DFT slices: the dominant HBM traffic, lane-dense p tiles.
            pl.BlockSpec((Kp, tp), lambda j: (0, j)),     # Grr
            pl.BlockSpec((Kp, tp), lambda j: (0, j)),     # Gir
            pl.BlockSpec((1, C, 1), lambda j: (0, 0, 0)),  # gamma
            pl.BlockSpec((1, C, 1), lambda j: (0, 0, 0)),  # beta
        ],
        out_specs=pl.BlockSpec((B, C, tp), lambda j: (0, 0, j)),
        scratch_shapes=[pltpu.VMEM((BC, Kp), matmul_dtype),   # Yr (freq domain, weighted)
                        pltpu.VMEM((BC, Kp), matmul_dtype)],  # Yi
        compiler_params=pltpu.CompilerParams(
            # Stage-1 scratch is reused by all later p-tiles => sequential grid axis.
            dimension_semantics=("arbitrary",),
            vmem_limit_bytes=_pick_vmem_limit(),
        ),
        cost_estimate=cost,
    )(x2, frm, fim, wre_rows, wim_rows, grm, gim, g3, b3)

    # (B, C_view, P) -> (B, P, C_view): per-batch flat index q*C + c == NCHW flat index.
    return jnp.transpose(out3, (0, 2, 1)).reshape(B, C, H, W)


# ----------------------------- numpy reference ----------------------------- #

def reference_forward(x, complex_weight, gamma, beta):
    x = np.asarray(x, dtype=np.float64)
    cw = np.asarray(complex_weight, dtype=np.float64)
    g = np.asarray(gamma, dtype=np.float64)
    bt = np.asarray(beta, dtype=np.float64)
    B, C, H, W = x.shape
    a = b = int(math.sqrt(H * W))
    Wc = cw[..., 0] + 1j * cw[..., 1]
    xv = x.reshape(B, a, b, C)                             # == torch .view(B, a, b, C)
    X = np.fft.rfft2(xv, axes=(1, 2), norm="ortho") * Wc[None]
    y = np.fft.irfft2(X, s=(a, b), axes=(1, 2), norm="ortho").reshape(B, C, H, W)
    mean = y.mean(-1, keepdims=True)
    var = ((y - mean) ** 2).mean(-1, keepdims=True)
    return (y - mean) / np.sqrt(var + 1e-5) * g + bt


# ---------------------------------- main ----------------------------------- #

if __name__ == "__main__":
    # Shapes implied by the module: H*W a perfect square (a = b = sqrt(H*W)), weight shape
    # (h, w, dim, 2) with h == a, w == b//2 + 1, and C == W == dim for the LayerNorm.
    # Demo: B=2, dim=16, H=W=16 -> a=b=16, h=16, w=9, P=256 (single 256-wide p-tile).
    B, dim, H, W = 2, 16, 16, 16
    a = b = int(math.sqrt(H * W))
    h, w = a, b // 2 + 1

    key = jax.random.PRNGKey(0)
    kx, kw, kg, kb = jax.random.split(key, 4)
    x = jax.random.normal(kx, (B, dim, H, W), dtype=jnp.float32)
    # GlobalFilter.__init__: torch.randn(h, w, dim, 2) * 0.02
    complex_weight = 0.02 * jax.random.normal(kw, (h, w, dim, 2), dtype=jnp.float32)
    # Non-trivial affine params so the LayerNorm scale/shift path is actually exercised.
    gamma = 1.0 + 0.1 * jax.random.normal(kg, (dim,), dtype=jnp.float32)
    beta = 0.05 * jax.random.normal(kb, (dim,), dtype=jnp.float32)

    dft_ops = build_dft_factorization(complex_weight, a, b, dim)
    ref = reference_forward(x, complex_weight, gamma, beta)

    # f32 operands: structural / math check of the fused kernel.
    out_f32 = jax.block_until_ready(
        block_forward(x, dft_ops, gamma, beta, matmul_dtype=jnp.float32))
    assert out_f32.shape == (B, dim, H, W)
    np.testing.assert_allclose(np.asarray(out_f32), ref, rtol=1e-2, atol=1e-2)

    # bf16 operands + f32 accumulation (default path: halves operator bytes): loose check.
    out_bf16 = jax.block_until_ready(
        block_forward(x, dft_ops, gamma, beta, matmul_dtype=jnp.bfloat16))
    assert out_bf16.shape == (B, dim, H, W)
    np.testing.assert_allclose(np.asarray(out_bf16), ref, rtol=5e-2, atol=1e-1)

    print("KERNEL_OK")
</pallas_src>

<mosaic_0001>
module attributes {stable_mosaic.version = 11 : i64} {
  func.func @_gf_ln_kernel(%arg0: i32, %arg1: memref<32x256xf32, #tpu.memory_space<vmem>>, %arg2: memref<256x256xf32, #tpu.memory_space<vmem>>, %arg3: memref<256x256xf32, #tpu.memory_space<vmem>>, %arg4: memref<32x256xf32, #tpu.memory_space<vmem>>, %arg5: memref<32x256xf32, #tpu.memory_space<vmem>>, %arg6: memref<256x256xf32, #tpu.memory_space<vmem>>, %arg7: memref<256x256xf32, #tpu.memory_space<vmem>>, %arg8: memref<1x16x1xf32, #tpu.memory_space<vmem>>, %arg9: memref<1x16x1xf32, #tpu.memory_space<vmem>>, %arg10: memref<2x16x256xf32, #tpu.memory_space<vmem>>, %arg11: memref<32x256xf32, #tpu.memory_space<vmem>>, %arg12: memref<32x256xf32, #tpu.memory_space<vmem>>) attributes {dimension_semantics = [#tpu.dimension_semantics<arbitrary>], iteration_bounds = array<i64: 1>, scalar_prefetch = 0 : i64, scratch_operands = 2 : i64, tpu.core_type = #tpu.core_type<tc>, window_params = [{pipeline_mode = #tpu.pipeline_mode<synchronous>, transform_indices = @transform_0, window_bounds = array<i64: 32, 256>}, {pipeline_mode = #tpu.pipeline_mode<synchronous>, transform_indices = @transform_1, window_bounds = array<i64: 256, 256>}, {pipeline_mode = #tpu.pipeline_mode<synchronous>, transform_indices = @transform_2, window_bounds = array<i64: 256, 256>}, {pipeline_mode = #tpu.pipeline_mode<synchronous>, transform_indices = @transform_3, window_bounds = array<i64: 32, 256>}, {pipeline_mode = #tpu.pipeline_mode<synchronous>, transform_indices = @transform_4, window_bounds = array<i64: 32, 256>}, {transform_indices = @transform_5, window_bounds = array<i64: 256, 256>}, {transform_indices = @transform_6, window_bounds = array<i64: 256, 256>}, {pipeline_mode = #tpu.pipeline_mode<synchronous>, transform_indices = @transform_7, window_bounds = array<i64: 1, 16, 1>}, {pipeline_mode = #tpu.pipeline_mode<synchronous>, transform_indices = @transform_8, window_bounds = array<i64: 1, 16, 1>}, {transform_indices = @transform_9, window_bounds = array<i64: 2, 16, 256>}]} {
    %c0_i32 = arith.constant 0 : i32
    %0 = arith.cmpi eq, %arg0, %c0_i32 : i32
    %1 = arith.extui %0 : i1 to i32
    %c0_i32_0 = arith.constant 0 : i32
    %2 = arith.cmpi ne, %1, %c0_i32_0 : i32
    scf.if %2 {
      %c0_23 = arith.constant 0 : index
      %c0_24 = arith.constant 0 : index
      %36 = vector.load %arg1[%c0_23, %c0_24] : memref<32x256xf32, #tpu.memory_space<vmem>>, vector<32x256xf32>
      %c0_25 = arith.constant 0 : index
      %c0_26 = arith.constant 0 : index
      %37 = vector.load %arg2[%c0_25, %c0_26] : memref<256x256xf32, #tpu.memory_space<vmem>>, vector<256x256xf32>
      %cst_27 = arith.constant dense<0.000000e+00> : vector<32x256xf32>
      %38 = tpu.matmul %36, %37, %cst_27 {dimension_numbers = #tpu.dot_dimension_numbers<[1], [0], [0], [1], [0, 0, 1, 1], [], []>} : vector<32x256xf32>, vector<256x256xf32>, vector<32x256xf32> -> vector<32x256xf32>
      %c0_28 = arith.constant 0 : index
      %c0_29 = arith.constant 0 : index
      %39 = vector.load %arg3[%c0_28, %c0_29] : memref<256x256xf32, #tpu.memory_space<vmem>>, vector<256x256xf32>
      %cst_30 = arith.constant dense<0.000000e+00> : vector<32x256xf32>
      %40 = tpu.matmul %36, %39, %cst_30 {dimension_numbers = #tpu.dot_dimension_numbers<[1], [0], [0], [1], [0, 0, 1, 1], [], []>} : vector<32x256xf32>, vector<256x256xf32>, vector<32x256xf32> -> vector<32x256xf32>
      %c0_31 = arith.constant 0 : index
      %c0_32 = arith.constant 0 : index
      %41 = vector.load %arg4[%c0_31, %c0_32] : memref<32x256xf32, #tpu.memory_space<vmem>>, vector<32x256xf32>
      %c0_33 = arith.constant 0 : index
      %c0_34 = arith.constant 0 : index
      %42 = vector.load %arg5[%c0_33, %c0_34] : memref<32x256xf32, #tpu.memory_space<vmem>>, vector<32x256xf32>
      %43 = arith.mulf %38, %41 : vector<32x256xf32>
      %44 = arith.mulf %40, %42 : vector<32x256xf32>
      %45 = arith.subf %43, %44 : vector<32x256xf32>
      %c0_35 = arith.constant 0 : index
      %c0_36 = arith.constant 0 : index
      %46 = vector.load %arg11[%c0_35, %c0_36] : memref<32x256xf32, #tpu.memory_space<vmem>>, vector<32x256xf32>
      tpu.vector_store %arg11[%c0_35, %c0_36], %45 {strides = array<i32>} : memref<32x256xf32, #tpu.memory_space<vmem>>, vector<32x256xf32>,
      %47 = arith.mulf %38, %42 : vector<32x256xf32>
      %48 = arith.mulf %40, %41 : vector<32x256xf32>
      %49 = arith.addf %47, %48 : vector<32x256xf32>
      %c0_37 = arith.constant 0 : index
      %c0_38 = arith.constant 0 : index
      %50 = vector.load %arg12[%c0_37, %c0_38] : memref<32x256xf32, #tpu.memory_space<vmem>>, vector<32x256xf32>
      tpu.vector_store %arg12[%c0_37, %c0_38], %49 {strides = array<i32>} : memref<32x256xf32, #tpu.memory_space<vmem>>, vector<32x256xf32>,
    } else {
    }
    %c0 = arith.constant 0 : index
    %c0_1 = arith.constant 0 : index
    %3 = vector.load %arg11[%c0, %c0_1] : memref<32x256xf32, #tpu.memory_space<vmem>>, vector<32x256xf32>
    %c0_2 = arith.constant 0 : index
    %c0_3 = arith.constant 0 : index
    %4 = vector.load %arg6[%c0_2, %c0_3] : memref<256x256xf32, #tpu.memory_space<vmem>>, vector<256x256xf32>
    %cst = arith.constant dense<0.000000e+00> : vector<32x256xf32>
    %5 = tpu.matmul %3, %4, %cst {dimension_numbers = #tpu.dot_dimension_numbers<[1], [0], [0], [1], [0, 0, 1, 1], [], []>} : vector<32x256xf32>, vector<256x256xf32>, vector<32x256xf32> -> vector<32x256xf32>
    %c0_4 = arith.constant 0 : index
    %c0_5 = arith.constant 0 : index
    %6 = vector.load %arg12[%c0_4, %c0_5] : memref<32x256xf32, #tpu.memory_space<vmem>>, vector<32x256xf32>
    %c0_6 = arith.constant 0 : index
    %c0_7 = arith.constant 0 : index
    %7 = vector.load %arg7[%c0_6, %c0_7] : memref<256x256xf32, #tpu.memory_space<vmem>>, vector<256x256xf32>
    %cst_8 = arith.constant dense<0.000000e+00> : vector<32x256xf32>
    %8 = tpu.matmul %6, %7, %cst_8 {dimension_numbers = #tpu.dot_dimension_numbers<[1], [0], [0], [1], [0, 0, 1, 1], [], []>} : vector<32x256xf32>, vector<256x256xf32>, vector<32x256xf32> -> vector<32x256xf32>
    %9 = arith.addf %5, %8 : vector<32x256xf32>
    %10 = vector.shape_cast %9 : vector<32x256xf32> to vector<2x16x256xf32>
    %cst_9 = arith.constant dense<0.000000e+00> : vector<2x256xf32>
    %11 = vector.multi_reduction <add>, %10, %cst_9 [1] : vector<2x16x256xf32> to vector<2x256xf32>
    %12 = vector.shape_cast %11 : vector<2x256xf32> to vector<2x1x256xf32>
    %cst_10 = arith.constant 1.600000e+01 : f32
    %13 = vector.broadcast %cst_10 : f32 to vector<2x1x256xf32>
    %14 = arith.divf %12, %13 : vector<2x1x256xf32>
    %15 = arith.mulf %10, %10 : vector<2x16x256xf32>
    %cst_11 = arith.constant dense<0.000000e+00> : vector<2x256xf32>
    %16 = vector.multi_reduction <add>, %15, %cst_11 [1] : vector<2x16x256xf32> to vector<2x256xf32>
    %17 = vector.shape_cast %16 : vector<2x256xf32> to vector<2x1x256xf32>
    %cst_12 = arith.constant 1.600000e+01 : f32
    %18 = vector.broadcast %cst_12 : f32 to vector<2x1x256xf32>
    %19 = arith.divf %17, %18 : vector<2x1x256xf32>
    %20 = arith.mulf %14, %14 : vector<2x1x256xf32>
    %21 = arith.subf %19, %20 : vector<2x1x256xf32>
    %cst_13 = arith.constant 9.99999974E-6 : f32
    %22 = vector.broadcast %cst_13 : f32 to vector<2x1x256xf32>
    %23 = arith.addf %21, %22 : vector<2x1x256xf32>
    %24 = math.rsqrt %23 : vector<2x1x256xf32>
    %25 = vector.broadcast %14 : vector<2x1x256xf32> to vector<2x16x256xf32>
    %26 = arith.subf %10, %25 : vector<2x16x256xf32>
    %27 = vector.broadcast %24 : vector<2x1x256xf32> to vector<2x16x256xf32>
    %28 = arith.mulf %26, %27 : vector<2x16x256xf32>
    %c0_14 = arith.constant 0 : index
    %c0_15 = arith.constant 0 : index
    %c0_16 = arith.constant 0 : index
    %29 = vector.load %arg8[%c0_14, %c0_15, %c0_16] : memref<1x16x1xf32, #tpu.memory_space<vmem>>, vector<1x16x1xf32>
    %30 = vector.broadcast %29 : vector<1x16x1xf32> to vector<2x16x256xf32>
    %31 = arith.mulf %28, %30 : vector<2x16x256xf32>
    %c0_17 = arith.constant 0 : index
    %c0_18 = arith.constant 0 : index
    %c0_19 = arith.constant 0 : index
    %32 = vector.load %arg9[%c0_17, %c0_18, %c0_19] : memref<1x16x1xf32, #tpu.memory_space<vmem>>, vector<1x16x1xf32>
    %33 = vector.broadcast %32 : vector<1x16x1xf32> to vector<2x16x256xf32>
    %34 = arith.addf %31, %33 : vector<2x16x256xf32>
    %c0_20 = arith.constant 0 : index
    %c0_21 = arith.constant 0 : index
    %c0_22 = arith.constant 0 : index
    %35 = vector.load %arg10[%c0_20, %c0_21, %c0_22] : memref<2x16x256xf32, #tpu.memory_space<vmem>>, vector<2x16x256xf32>
    tpu.vector_store %arg10[%c0_20, %c0_21, %c0_22], %34 {strides = array<i32>} : memref<2x16x256xf32, #tpu.memory_space<vmem>>, vector<2x16x256xf32>,
    return
  }
  func.func @transform_0(%arg0: i32) -> (i32, i32) {
    %c0_i32 = arith.constant 0 : i32
    %c0_i32_0 = arith.constant 0 : i32
    %c0_i32_1 = arith.constant 0 : i32
    return %c0_i32, %c0_i32_0 : i32, i32
  }
  func.func @transform_1(%arg0: i32) -> (i32, i32) {
    %c0_i32 = arith.constant 0 : i32
    %c0_i32_0 = arith.constant 0 : i32
    %c0_i32_1 = arith.constant 0 : i32
    return %c0_i32, %c0_i32_0 : i32, i32
  }
  func.func @transform_2(%arg0: i32) -> (i32, i32) {
    %c0_i32 = arith.constant 0 : i32
    %c0_i32_0 = arith.constant 0 : i32
    %c0_i32_1 = arith.constant 0 : i32
    return %c0_i32, %c0_i32_0 : i32, i32
  }
  func.func @transform_3(%arg0: i32) -> (i32, i32) {
    %c0_i32 = arith.constant 0 : i32
    %c0_i32_0 = arith.constant 0 : i32
    %c0_i32_1 = arith.constant 0 : i32
    return %c0_i32, %c0_i32_0 : i32, i32
  }
  func.func @transform_4(%arg0: i32) -> (i32, i32) {
    %c0_i32 = arith.constant 0 : i32
    %c0_i32_0 = arith.constant 0 : i32
    %c0_i32_1 = arith.constant 0 : i32
    return %c0_i32, %c0_i32_0 : i32, i32
  }
  func.func @transform_5(%arg0: i32) -> (i32, i32) {
    %c0_i32 = arith.constant 0 : i32
    %c0_i32_0 = arith.constant 0 : i32
    return %c0_i32, %arg0 : i32, i32
  }
  func.func @transform_6(%arg0: i32) -> (i32, i32) {
    %c0_i32 = arith.constant 0 : i32
    %c0_i32_0 = arith.constant 0 : i32
    return %c0_i32, %arg0 : i32, i32
  }
  func.func @transform_7(%arg0: i32) -> (i32, i32, i32) {
    %c0_i32 = arith.constant 0 : i32
    %c0_i32_0 = arith.constant 0 : i32
    %c0_i32_1 = arith.constant 0 : i32
    %c0_i32_2 = arith.constant 0 : i32
    return %c0_i32, %c0_i32_0, %c0_i32_1 : i32, i32, i32
  }
  func.func @transform_8(%arg0: i32) -> (i32, i32, i32) {
    %c0_i32 = arith.constant 0 : i32
    %c0_i32_0 = arith.constant 0 : i32
    %c0_i32_1 = arith.constant 0 : i32
    %c0_i32_2 = arith.constant 0 : i32
    return %c0_i32, %c0_i32_0, %c0_i32_1 : i32, i32, i32
  }
  func.func @transform_9(%arg0: i32) -> (i32, i32, i32) {
    %c0_i32 = arith.constant 0 : i32
    %c0_i32_0 = arith.constant 0 : i32
    %c0_i32_1 = arith.constant 0 : i32
    return %c0_i32, %c0_i32_0, %arg0 : i32, i32, i32
  }
}

</mosaic_0001>

<llo_original>
// kernel: tpu_custom_call.1
$region0: #{tpu_custom_call.1}
  #allocation0 [shape = 'u32[]', space=smem, size = 0x4, offset = 0x4, fixed_abs, tag = 'smem constant byte address 0x4 - core index']
  #allocation1 [shape = 'u32[144,128]{1,0:T(1,128)}', space=vmem, size = 0x12000, scoped, tag = 'internal scratch']
  #allocation2 [shape = 'f32[32,256]{1,0:T(8,128)}', space=vmem, size = 0x8000, scoped, tag = 'scratch operand']
  #allocation3 [shape = 'f32[32,256]{1,0:T(8,128)}', space=vmem, size = 0x8000, scoped, tag = 'scratch operand']
  %s0 = inlined_call_operand.hbm [shape: f32[32,256], index: 0, kind: input, shape index: {}]
  %s1 = inlined_call_operand.hbm [shape: f32[256,256], index: 1, kind: input, shape index: {}]
  %s2 = inlined_call_operand.hbm [shape: f32[256,256], index: 2, kind: input, shape index: {}]
  %s3 = inlined_call_operand.hbm [shape: f32[32,256], index: 3, kind: input, shape index: {}]
  %s4 = inlined_call_operand.hbm [shape: f32[32,256], index: 4, kind: input, shape index: {}]
  %s5 = inlined_call_operand.hbm [shape: f32[256,256], index: 5, kind: input, shape index: {}]
  %s6 = inlined_call_operand.hbm [shape: f32[256,256], index: 6, kind: input, shape index: {}]
  %s7 = inlined_call_operand.vmem [shape: f32[1,16,1], index: 7, kind: input, shape index: {}]
  %s8 = inlined_call_operand.vmem [shape: f32[1,16,1], index: 8, kind: input, shape index: {}]
  %s9 = inlined_call_operand.hbm [shape: f32[2,16,256], index: 9, kind: output, shape index: {}]
  %s10 = sld [smem:[#allocation0]]
  $region78: #{tpu_custom_call.1} parent=0
    _
  %s12 = ssub.s32 1, %s10
  %s13 = scalar_select 0, %s12, %s10
  $region1: #{tpu_custom_call.1} parent=0
    #allocation4 [shape = 'u8[32768]{0}', space=vmem, size = 0x8000, scoped, tag = 'input window, operand 0, single buffered']
    #allocation5 [shape = 's32[1]{0}', space=sflag, size = 0x4, scoped, tag = 'scoped memory for tpu_custom_call.1']
    #allocation6 [shape = 's32[1]{0}', space=sflag, size = 0x4, scoped, tag = 'scoped memory for tpu_custom_call.1']
    #allocation7 [shape = 'u8[262144]{0}', space=vmem, size = 0x40000, scoped, tag = 'input window, operand 1, single buffered']
    #allocation8 [shape = 's32[1]{0}', space=sflag, size = 0x4, scoped, tag = 'scoped memory for tpu_custom_call.1']
    #allocation9 [shape = 'u8[262144]{0}', space=vmem, size = 0x40000, scoped, tag = 'input window, operand 2, single buffered']
    #allocation10 [shape = 'u8[32768]{0}', space=vmem, size = 0x8000, scoped, tag = 'input window, operand 3, single buffered']
    #allocation11 [shape = 's32[1]{0}', space=sflag, size = 0x4, scoped, tag = 'scoped memory for tpu_custom_call.1']
    #allocation12 [shape = 'u8[32768]{0}', space=vmem, size = 0x8000, scoped, tag = 'input window, operand 4, single buffered']
    #allocation13 [shape = 'u8[262144]{0}', space=vmem, size = 0x40000, scoped, tag = 'input window, operand 5, single buffered']
    #allocation14 [shape = 's32[1]{0}', space=sflag, size = 0x4, scoped, tag = 'scoped memory for tpu_custom_call.1']
    #allocation15 [shape = 'u8[262144]{0}', space=vmem, size = 0x40000, scoped, tag = 'input window, operand 6, single buffered']
    #allocation16 [shape = 'u8[32768]{0}', space=vmem, size = 0x8000, scoped, tag = 'output window, operand 0, single buffered']
    %14 = vsyncpa [#allocation5], 0
    %15 = vsyncpa [#allocation8], 0
    %16 = vsyncpa [#allocation11], 0
    %17 = vsyncpa [#allocation14], 0
    %18 = vsyncpa [#allocation6], 0
    // Predicated region
    $region2: #{tpu_custom_call.1} parent=1 // pred_check
      _
    $region3: #{tpu_custom_call.1} parent=1 // pred_check_branch
      %20 = sbr.rel (0) target = $region5
    $region4: #{tpu_custom_call.1} parent=1 // pred_region
      %s22 = ssub.s32 1024, 1024
      %23 = vsyncadd [#allocation5], %s22
      %s24 = sshll.u32 [#allocation4], 4
      %s25 = int_to_ptr.vmem [resolvable:$true] %s24
      %30 = dma.hbm_to_vmem [thread:$0]  %s0, 1024, %s25, [#allocation5], 256, 256, 16
    $region5: #{tpu_custom_call.1} parent=1 // pred_fallthru
      _
    // Predicated region
    $region6: #{tpu_custom_call.1} parent=1 // pred_check
      _
    $region7: #{tpu_custom_call.1} parent=1 // pred_check_branch
      %32 = sbr.rel (0) target = $region9
    $region8: #{tpu_custom_call.1} parent=1 // pred_region
      %s34 = ssub.s32 8192, 8192
      %35 = vsyncadd [#allocation8], %s34
      %s36 = sshll.u32 [#allocation7], 4
      %s37 = int_to_ptr.vmem [resolvable:$true] %s36
      %42 = dma.hbm_to_vmem [thread:$0]  %s1, 8192, %s37, [#allocation8], 256, 256, 16
    $region9: #{tpu_custom_call.1} parent=1 // pred_fallthru
      _
    // Predicated region
    $region10: #{tpu_custom_call.1} parent=1 // pred_check
      _
    $region11: #{tpu_custom_call.1} parent=1 // pred_check_branch
      %44 = sbr.rel (0) target = $region13
    $region12: #{tpu_custom_call.1} parent=1 // pred_region
      %s46 = ssub.s32 8192, 8192
      %47 = vsyncadd [#allocation8], %s46
      %s48 = sshll.u32 [#allocation9], 4
      %s49 = int_to_ptr.vmem [resolvable:$true] %s48
      %54 = dma.hbm_to_vmem [thread:$0]  %s2, 8192, %s49, [#allocation8], 256, 256, 16
    $region13: #{tpu_custom_call.1} parent=1 // pred_fallthru
      _
    // Predicated region
    $region14: #{tpu_custom_call.1} parent=1 // pred_check
      _
    $region15: #{tpu_custom_call.1} parent=1 // pred_check_branch
      %56 = sbr.rel (0) target = $region17
    $region16: #{tpu_custom_call.1} parent=1 // pred_region
      %s58 = ssub.s32 1024, 1024
      %59 = vsyncadd [#allocation11], %s58
      %s60 = sshll.u32 [#allocation10], 4
      %s61 = int_to_ptr.vmem [resolvable:$true] %s60
      %66 = dma.hbm_to_vmem [thread:$0]  %s3, 1024, %s61, [#allocation11], 256, 256, 16
    $region17: #{tpu_custom_call.1} parent=1 // pred_fallthru
      _
    // Predicated region
    $region18: #{tpu_custom_call.1} parent=1 // pred_check
      _
    $region19: #{tpu_custom_call.1} parent=1 // pred_check_branch
      %68 = sbr.rel (0) target = $region21
    $region20: #{tpu_custom_call.1} parent=1 // pred_region
      %s70 = ssub.s32 1024, 1024
      %71 = vsyncadd [#allocation11], %s70
      %s72 = sshll.u32 [#allocation12], 4
      %s73 = int_to_ptr.vmem [resolvable:$true] %s72
      %78 = dma.hbm_to_vmem [thread:$0]  %s4, 1024, %s73, [#allocation11], 256, 256, 16
    $region21: #{tpu_custom_call.1} parent=1 // pred_fallthru
      _
    // Predicated region
    $region22: #{tpu_custom_call.1} parent=1 // pred_check
      _
    $region23: #{tpu_custom_call.1} parent=1 // pred_check_branch
      %80 = sbr.rel (0) target = $region25
    $region24: #{tpu_custom_call.1} parent=1 // pred_region
      %s82 = ssub.s32 8192, 8192
      %83 = vsyncadd [#allocation14], %s82
      %s84 = sshll.u32 [#allocation13], 4
      %s85 = int_to_ptr.vmem [resolvable:$true] %s84
      %90 = dma.hbm_to_vmem [thread:$0]  %s5, 8192, %s85, [#allocation14], 256, 256, 16
    $region25: #{tpu_custom_call.1} parent=1 // pred_fallthru
      _
    // Predicated region
    $region26: #{tpu_custom_call.1} parent=1 // pred_check
      _
    $region27: #{tpu_custom_call.1} parent=1 // pred_check_branch
      %92 = sbr.rel (0) target = $region29
    $region28: #{tpu_custom_call.1} parent=1 // pred_region
      %s94 = ssub.s32 8192, 8192
      %95 = vsyncadd [#allocation14], %s94
      %s96 = sshll.u32 [#allocation15], 4
      %s97 = int_to_ptr.vmem [resolvable:$true] %s96
      %102 = dma.hbm_to_vmem [thread:$0]  %s6, 8192, %s97, [#allocation14], 256, 256, 16
    $region29: #{tpu_custom_call.1} parent=1 // pred_fallthru
      _
    // Predicated region
    $region30: #{tpu_custom_call.1} parent=1 // pred_check
      _
    $region31: #{tpu_custom_call.1} parent=1 // pred_check_branch
      %104 = sbr.rel (0) target = $region33
    $region32: #{tpu_custom_call.1} parent=1 // pred_region
      _
    $region33: #{tpu_custom_call.1} parent=1 // pred_fallthru
      _
    // Predicated region
    $region34: #{tpu_custom_call.1} parent=1 // pred_check
      _
    $region35: #{tpu_custom_call.1} parent=1 // pred_check_branch
      %106 = sbr.rel (0) target = $region37
    $region36: #{tpu_custom_call.1} parent=1 // pred_region
      _
    $region37: #{tpu_custom_call.1} parent=1 // pred_fallthru
      _
    // Predicated region
    $region38: #{tpu_custom_call.1} parent=1 // pred_check
      _
    $region39: #{tpu_custom_call.1} parent=1 // pred_check_branch
      %108 = sbr.rel (0) target = $region41
    $region40: #{tpu_custom_call.1} parent=1 // pred_region
      %109 = dma.done [#allocation5], 1024
    $region41: #{tpu_custom_call.1} parent=1 // pred_fallthru
      _
    // Predicated region
    $region42: #{tpu_custom_call.1} parent=1 // pred_check
      _
    $region43: #{tpu_custom_call.1} parent=1 // pred_check_branch
      %111 = sbr.rel (0) target = $region45
    $region44: #{tpu_custom_call.1} parent=1 // pred_region
      %112 = dma.done [#allocation8], 8192
    $region45: #{tpu_custom_call.1} parent=1 // pred_fallthru
      _
    // Predicated region
    $region46: #{tpu_custom_call.1} parent=1 // pred_check
      _
    $region47: #{tpu_custom_call.1} parent=1 // pred_check_branch
      %114 = sbr.rel (0) target = $region49
    $region48: #{tpu_custom_call.1} parent=1 // pred_region
      %115 = dma.done [#allocation8], 8192
    $region49: #{tpu_custom_call.1} parent=1 // pred_fallthru
      _
    // Predicated region
    $region50: #{tpu_custom_call.1} parent=1 // pred_check
      _
    $region51: #{tpu_custom_call.1} parent=1 // pred_check_branch
      %117 = sbr.rel (0) target = $region53
    $region52: #{tpu_custom_call.1} parent=1 // pred_region
      %118 = dma.done [#allocation11], 1024
    $region53: #{tpu_custom_call.1} parent=1 // pred_fallthru
      _
    // Predicated region
    $region54: #{tpu_custom_call.1} parent=1 // pred_check
      _
    $region55: #{tpu_custom_call.1} parent=1 // pred_check_branch
      %120 = sbr.rel (0) target = $region57
    $region56: #{tpu_custom_call.1} parent=1 // pred_region
      %121 = dma.done [#allocation11], 1024
    $region57: #{tpu_custom_call.1} parent=1 // pred_fallthru
      _
    // Predicated region
    $region58: #{tpu_custom_call.1} parent=1 // pred_check
      _
    $region59: #{tpu_custom_call.1} parent=1 // pred_check_branch
      %123 = sbr.rel (0) target = $region61
    $region60: #{tpu_custom_call.1} parent=1 // pred_region
      %124 = dma.done [#allocation14], 8192
    $region61: #{tpu_custom_call.1} parent=1 // pred_fallthru
      _
    // Predicated region
    $region62: #{tpu_custom_call.1} parent=1 // pred_check
      _
    $region63: #{tpu_custom_call.1} parent=1 // pred_check_branch
      %126 = sbr.rel (0) target = $region65
    $region64: #{tpu_custom_call.1} parent=1 // pred_region
      %127 = dma.done [#allocation14], 8192
    $region65: #{tpu_custom_call.1} parent=1 // pred_fallthru
      _
    %p128 = scmp.eq.s32.totalorder 0, 0
    // Predicated region
    $region66: #{tpu_custom_call.1} parent=1 // pred_check
      %p129 = pneg %p128
    $region67: #{tpu_custom_call.1} parent=1 // pred_check_branch
      %131 = sbr.rel (%p129) target = $region69
    $region68: #{tpu_custom_call.1} parent=1 // pred_region
      %v132 = vld [vmem:[#allocation4] sm:$0xff]
      %v133 = vld [vmem:[#allocation4 + $0x8] sm:$0xff]
      %v134 = vld [vmem:[#allocation4 + $0x10] sm:$0xff]
      %v135 = vld [vmem:[#allocation4 + $0x18] sm:$0xff]
      %v136 = vld [vmem:[#allocation4 + $0x20] sm:$0xff]
      %v137 = vld [vmem:[#allocation4 + $0x28] sm:$0xff]
      %v138 = vld [vmem:[#allocation4 + $0x30] sm:$0xff]
      %v139 = vld [vmem:[#allocation4 + $0x38] sm:$0xff]
      %v140 = vld [vmem:[#allocation7] sm:$0xff]
      %v141 = vld [vmem:[#allocation7 + $0x8] sm:$0xff]
      %v142 = vld [vmem:[#allocation7 + $0x10] sm:$0xff]
      %v143 = vld [vmem:[#allocation7 + $0x18] sm:$0xff]
      %v144 = vld [vmem:[#allocation7 + $0x20] sm:$0xff]
      %v145 = vld [vmem:[#allocation7 + $0x28] sm:$0xff]
      %v146 = vld [vmem:[#allocation7 + $0x30] sm:$0xff]
      %v147 = vld [vmem:[#allocation7 + $0x38] sm:$0xff]
      %v148 = vld [vmem:[#allocation7 + $0x40] sm:$0xff]
      %v149 = vld [vmem:[#allocation7 + $0x48] sm:$0xff]
      %v150 = vld [vmem:[#allocation7 + $0x50] sm:$0xff]
      %v151 = vld [vmem:[#allocation7 + $0x58] sm:$0xff]
      %v152 = vld [vmem:[#allocation7 + $0x60] sm:$0xff]
      %v153 = vld [vmem:[#allocation7 + $0x68] sm:$0xff]
      %v154 = vld [vmem:[#allocation7 + $0x70] sm:$0xff]
      %v155 = vld [vmem:[#allocation7 + $0x78] sm:$0xff]
      %v156 = vld [vmem:[#allocation7 + $0x80] sm:$0xff]
      %v157 = vld [vmem:[#allocation7 + $0x88] sm:$0xff]
      %v158 = vld [vmem:[#allocation7 + $0x90] sm:$0xff]
      %v159 = vld [vmem:[#allocation7 + $0x98] sm:$0xff]
      %v160 = vld [vmem:[#allocation7 + $0xa0] sm:$0xff]
      %v161 = vld [vmem:[#allocation7 + $0xa8] sm:$0xff]
      %v162 = vld [vmem:[#allocation7 + $0xb0] sm:$0xff]
      %v163 = vld [vmem:[#allocation7 + $0xb8] sm:$0xff]
      %v164 = vld [vmem:[#allocation7 + $0xc0] sm:$0xff]
      %v165 = vld [vmem:[#allocation7 + $0xc8] sm:$0xff]
      %v166 = vld [vmem:[#allocation7 + $0xd0] sm:$0xff]
      %v167 = vld [vmem:[#allocation7 + $0xd8] sm:$0xff]
      %v168 = vld [vmem:[#allocation7 + $0xe0] sm:$0xff]
      %v169 = vld [vmem:[#allocation7 + $0xe8] sm:$0xff]
      %v170 = vld [vmem:[#allocation7 + $0xf0] sm:$0xff]
      %v171 = vld [vmem:[#allocation7 + $0xf8] sm:$0xff]
      %v172 = vld [vmem:[#allocation7 + $0x100] sm:$0xff]
      %v173 = vld [vmem:[#allocation7 + $0x108] sm:$0xff]
      %v174 = vld [vmem:[#allocation7 + $0x110] sm:$0xff]
      %v175 = vld [vmem:[#allocation7 + $0x118] sm:$0xff]
      %v176 = vld [vmem:[#allocation7 + $0x120] sm:$0xff]
      %v177 = vld [vmem:[#allocation7 + $0x128] sm:$0xff]
      %v178 = vld [vmem:[#allocation7 + $0x130] sm:$0xff]
      %v179 = vld [vmem:[#allocation7 + $0x138] sm:$0xff]
      %v180 = vld [vmem:[#allocation7 + $0x140] sm:$0xff]
      %v181 = vld [vmem:[#allocation7 + $0x148] sm:$0xff]
      %v182 = vld [vmem:[#allocation7 + $0x150] sm:$0xff]
      %v183 = vld [vmem:[#allocation7 + $0x158] sm:$0xff]
      %v184 = vld [vmem:[#allocation7 + $0x160] sm:$0xff]
      %v185 = vld [vmem:[#allocation7 + $0x168] sm:$0xff]
      %v186 = vld [vmem:[#allocation7 + $0x170] sm:$0xff]
      %v187 = vld [vmem:[#allocation7 + $0x178] sm:$0xff]
      %v188 = vld [vmem:[#allocation7 + $0x180] sm:$0xff]
      %v189 = vld [vmem:[#allocation7 + $0x188] sm:$0xff]
      %v190 = vld [vmem:[#allocation7 + $0x190] sm:$0xff]
      %v191 = vld [vmem:[#allocation7 + $0x198] sm:$0xff]
      %v192 = vld [vmem:[#allocation7 + $0x1a0] sm:$0xff]
      %v193 = vld [vmem:[#allocation7 + $0x1a8] sm:$0xff]
      %v194 = vld [vmem:[#allocation7 + $0x1b0] sm:$0xff]
      %v195 = vld [vmem:[#allocation7 + $0x1b8] sm:$0xff]
      %v196 = vld [vmem:[#allocation7 + $0x1c0] sm:$0xff]
      %v197 = vld [vmem:[#allocation7 + $0x1c8] sm:$0xff]
      %v198 = vld [vmem:[#allocation7 + $0x1d0] sm:$0xff]
      %v199 = vld [vmem:[#allocation7 + $0x1d8] sm:$0xff]
      %v200 = vld [vmem:[#allocation7 + $0x1e0] sm:$0xff]
      %v201 = vld [vmem:[#allocation7 + $0x1e8] sm:$0xff]
      %v202 = vld [vmem:[#allocation7 + $0x1f0] sm:$0xff]
      %v203 = vld [vmem:[#allocation7 + $0x1f8] sm:$0xff]
      %204 = vmatprep.subr.mxu0 %v141
      %205 = vmatpush1.msra.mxu0 %v140
      %206 = vmatprep.subr.mxu0 %v143
      %207 = vmatpush1.msra.mxu0 %v142
      %208 = vmatprep.subr.mxu0 %v145
      %209 = vmatpush1.msra.mxu0 %v144
      %210 = vmatprep.subr.mxu0 %v147
      %211 = vmatpush1.msra.mxu0 %v146
      %212 = vmatprep.subr.mxu0 %v149
      %213 = vmatpush1.msra.mxu0 %v148
      %214 = vmatprep.subr.mxu0 %v151
      %215 = vmatpush1.msra.mxu0 %v150
      %216 = vmatprep.subr.mxu0 %v153
      %217 = vmatpush1.msra.mxu0 %v152
      %218 = vmatprep.subr.mxu0 %v155
      %219 = vmatpush1.msra.mxu0 %v154
      %220 = vmatprep.subr.mxu0 %v157
      %221 = vmatpush1.msra.mxu0 %v156
      %222 = vmatprep.subr.mxu0 %v159
      %223 = vmatpush1.msra.mxu0 %v158
      %224 = vmatprep.subr.mxu0 %v161
      %225 = vmatpush1.msra.mxu0 %v160
      %226 = vmatprep.subr.mxu0 %v163
      %227 = vmatpush1.msra.mxu0 %v162
      %228 = vmatprep.subr.mxu0 %v165
      %229 = vmatpush1.msra.mxu0 %v164
      %230 = vmatprep.subr.mxu0 %v167
      %231 = vmatpush1.msra.mxu0 %v166
      %232 = vmatprep.subr.mxu0 %v169
      %233 = vmatpush1.msra.mxu0 %v168
      %234 = vmatprep.subr.mxu0 %v171
      %235 = vmatpush1.msra.mxu0 %v170
      %236 = vmatprep.subr.mxu0 %v173
      %237 = vmatpush1.msra.mxu0 %v172
      %238 = vmatprep.subr.mxu0 %v175
      %239 = vmatpush1.msra.mxu0 %v174
      %240 = vmatprep.subr.mxu0 %v177
      %241 = vmatpush1.msra.mxu0 %v176
      %242 = vmatprep.subr.mxu0 %v179
      %243 = vmatpush1.msra.mxu0 %v178
      %244 = vmatprep.subr.mxu0 %v181
      %245 = vmatpush1.msra.mxu0 %v180
      %246 = vmatprep.subr.mxu0 %v183
      %247 = vmatpush1.msra.mxu0 %v182
      %248 = vmatprep.subr.mxu0 %v185
      %249 = vmatpush1.msra.mxu0 %v184
      %250 = vmatprep.subr.mxu0 %v187
      %251 = vmatpush1.msra.mxu0 %v186
      %252 = vmatprep.subr.mxu0 %v189
      %253 = vmatpush1.msra.mxu0 %v188
      %254 = vmatprep.subr.mxu0 %v191
      %255 = vmatpush1.msra.mxu0 %v190
      %256 = vmatprep.subr.mxu0 %v193
      %257 = vmatpush1.msra.mxu0 %v192
      %258 = vmatprep.subr.mxu0 %v195
      %259 = vmatpush1.msra.mxu0 %v194
      %260 = vmatprep.subr.mxu0 %v197
      %261 = vmatpush1.msra.mxu0 %v196
      %262 = vmatprep.subr.mxu0 %v199
      %263 = vmatpush1.msra.mxu0 %v198
      %264 = vmatprep.subr.mxu0 %v201
      %265 = vmatpush1.msra.mxu0 %v200
      %266 = vmatprep.subr.mxu0 %v203
      %267 = vmatpush1.msra.mxu0 %v202
      %268 = vmatprep.mubr.f32.mxu0 %v133
      %269 = vmatmul.mubr.f32.gmra.mrb[0].mxu0 %v132
      %v270 = vpop.f32.mrb[0].mxu0
      %v271 = vadd.f32 0.0, %v270
      %v272 = vpop.f32.mrb[0].mxu0
      %v273 = vadd.f32 0.0, %v272
      %274 = vmatprep.mubr.f32.mxu0 %v135
      %275 = vmatmul.mubr.f32.gmra.mrb[0].mxu0 %v134
      %v276 = vpop.f32.mrb[0].mxu0
      %v277 = vadd.f32 0.0, %v276
      %v278 = vpop.f32.mrb[0].mxu0
      %v279 = vadd.f32 0.0, %v278
      %280 = vmatprep.mubr.f32.mxu0 %v137
      %281 = vmatmul.mubr.f32.gmra.mrb[0].mxu0 %v136
      %v282 = vpop.f32.mrb[0].mxu0
      %v283 = vadd.f32 0.0, %v282
      %v284 = vpop.f32.mrb[0].mxu0
      %v285 = vadd.f32 0.0, %v284
      %286 = vmatprep.mubr.f32.mxu0 %v139
      %287 = vmatmul.mubr.f32.gmra.mrb[0].mxu0 %v138
      %v288 = vpop.f32.mrb[0].mxu0
      %v289 = vadd.f32 0.0, %v288
      %v290 = vpop.f32.mrb[0].mxu0
      %v291 = vadd.f32 0.0, %v290
      %292 = vdwg.mxu0
      %v293 = vld [vmem:[#allocation9] sm:$0xff]
      %v294 = vld [vmem:[#allocation9 + $0x8] sm:$0xff]
      %v295 = vld [vmem:[#allocation9 + $0x10] sm:$0xff]
      %v296 = vld [vmem:[#allocation9 + $0x18] sm:$0xff]
      %v297 = vld [vmem:[#allocation9 + $0x20] sm:$0xff]
      %v298 = vld [vmem:[#allocation9 + $0x28] sm:$0xff]
      %v299 = vld [vmem:[#allocation9 + $0x30] sm:$0xff]
      %v300 = vld [vmem:[#allocation9 + $0x38] sm:$0xff]
      %v301 = vld [vmem:[#allocation9 + $0x40] sm:$0xff]
      %v302 = vld [vmem:[#allocation9 + $0x48] sm:$0xff]
      %v303 = vld [vmem:[#allocation9 + $0x50] sm:$0xff]
      %v304 = vld [vmem:[#allocation9 + $0x58] sm:$0xff]
      %v305 = vld [vmem:[#allocation9 + $0x60] sm:$0xff]
      %v306 = vld [vmem:[#allocation9 + $0x68] sm:$0xff]
      %v307 = vld [vmem:[#allocation9 + $0x70] sm:$0xff]
      %v308 = vld [vmem:[#allocation9 + $0x78] sm:$0xff]
      %v309 = vld [vmem:[#allocation9 + $0x80] sm:$0xff]
      %v310 = vld [vmem:[#allocation9 + $0x88] sm:$0xff]
      %v311 = vld [vmem:[#allocation9 + $0x90] sm:$0xff]
      %v312 = vld [vmem:[#allocation9 + $0x98] sm:$0xff]
      %v313 = vld [vmem:[#allocation9 + $0xa0] sm:$0xff]
      %v314 = vld [vmem:[#allocation9 + $0xa8] sm:$0xff]
      %v315 = vld [vmem:[#allocation9 + $0xb0] sm:$0xff]
      %v316 = vld [vmem:[#allocation9 + $0xb8] sm:$0xff]
      %v317 = vld [vmem:[#allocation9 + $0xc0] sm:$0xff]
      %v318 = vld [vmem:[#allocation9 + $0xc8] sm:$0xff]
      %v319 = vld [vmem:[#allocation9 + $0xd0] sm:$0xff]
      %v320 = vld [vmem:[#allocation9 + $0xd8] sm:$0xff]
      %v321 = vld [vmem:[#allocation9 + $0xe0] sm:$0xff]
      %v322 = vld [vmem:[#allocation9 + $0xe8] sm:$0xff]
      %v323 = vld [vmem:[#allocation9 + $0xf0] sm:$0xff]
      %v324 = vld [vmem:[#allocation9 + $0xf8] sm:$0xff]
      %v325 = vld [vmem:[#allocation9 + $0x100] sm:$0xff]
      %v326 = vld [vmem:[#allocation9 + $0x108] sm:$0xff]
      %v327 = vld [vmem:[#allocation9 + $0x110] sm:$0xff]
      %v328 = vld [vmem:[#allocation9 + $0x118] sm:$0xff]
      %v329 = vld [vmem:[#allocation9 + $0x120] sm:$0xff]
      %v330 = vld [vmem:[#allocation9 + $0x128] sm:$0xff]
      %v331 = vld [vmem:[#allocation9 + $0x130] sm:$0xff]
      %v332 = vld [vmem:[#allocation9 + $0x138] sm:$0xff]
      %v333 = vld [vmem:[#allocation9 + $0x140] sm:$0xff]
      %v334 = vld [vmem:[#allocation9 + $0x148] sm:$0xff]
      %v335 = vld [vmem:[#allocation9 + $0x150] sm:$0xff]
      %v336 = vld [vmem:[#allocation9 + $0x158] sm:$0xff]
      %v337 = vld [vmem:[#allocation9 + $0x160] sm:$0xff]
      %v338 = vld [vmem:[#allocation9 + $0x168] sm:$0xff]
      %v339 = vld [vmem:[#allocation9 + $0x170] sm:$0xff]
      %v340 = vld [vmem:[#allocation9 + $0x178] sm:$0xff]
      %v341 = vld [vmem:[#allocation9 + $0x180] sm:$0xff]
      %v342 = vld [vmem:[#allocation9 + $0x188] sm:$0xff]
      %v343 = vld [vmem:[#allocation9 + $0x190] sm:$0xff]
      %v344 = vld [vmem:[#allocation9 + $0x198] sm:$0xff]
      %v345 = vld [vmem:[#allocation9 + $0x1a0] sm:$0xff]
      %v346 = vld [vmem:[#allocation9 + $0x1a8] sm:$0xff]
      %v347 = vld [vmem:[#allocation9 + $0x1b0] sm:$0xff]
      %v348 = vld [vmem:[#allocation9 + $0x1b8] sm:$0xff]
      %v349 = vld [vmem:[#allocation9 + $0x1c0] sm:$0xff]
      %v350 = vld [vmem:[#allocation9 + $0x1c8] sm:$0xff]
      %v351 = vld [vmem:[#allocation9 + $0x1d0] sm:$0xff]
      %v352 = vld [vmem:[#allocation9 + $0x1d8] sm:$0xff]
      %v353 = vld [vmem:[#allocation9 + $0x1e0] sm:$0xff]
      %v354 = vld [vmem:[#allocation9 + $0x1e8] sm:$0xff]
      %v355 = vld [vmem:[#allocation9 + $0x1f0] sm:$0xff]
      %v356 = vld [vmem:[#allocation9 + $0x1f8] sm:$0xff]
      %357 = vmatprep.subr.mxu0 %v294
      %358 = vmatpush1.msra.mxu0 %v293
      %359 = vmatprep.subr.mxu0 %v296
      %360 = vmatpush1.msra.mxu0 %v295
      %361 = vmatprep.subr.mxu0 %v298
      %362 = vmatpush1.msra.mxu0 %v297
      %363 = vmatprep.subr.mxu0 %v300
      %364 = vmatpush1.msra.mxu0 %v299
      %365 = vmatprep.subr.mxu0 %v302
      %366 = vmatpush1.msra.mxu0 %v301
      %367 = vmatprep.subr.mxu0 %v304
      %368 = vmatpush1.msra.mxu0 %v303
      %369 = vmatprep.subr.mxu0 %v306
      %370 = vmatpush1.msra.mxu0 %v305
      %371 = vmatprep.subr.mxu0 %v308
      %372 = vmatpush1.msra.mxu0 %v307
      %373 = vmatprep.subr.mxu0 %v310
      %374 = vmatpush1.msra.mxu0 %v309
      %375 = vmatprep.subr.mxu0 %v312
      %376 = vmatpush1.msra.mxu0 %v311
      %377 = vmatprep.subr.mxu0 %v314
      %378 = vmatpush1.msra.mxu0 %v313
      %379 = vmatprep.subr.mxu0 %v316
      %380 = vmatpush1.msra.mxu0 %v315
      %381 = vmatprep.subr.mxu0 %v318
      %382 = vmatpush1.msra.mxu0 %v317
      %383 = vmatprep.subr.mxu0 %v320
      %384 = vmatpush1.msra.mxu0 %v319
      %385 = vmatprep.subr.mxu0 %v322
      %386 = vmatpush1.msra.mxu0 %v321
      %387 = vmatprep.subr.mxu0 %v324
      %388 = vmatpush1.msra.mxu0 %v323
      %389 = vmatprep.subr.mxu0 %v326
      %390 = vmatpush1.msra.mxu0 %v325
      %391 = vmatprep.subr.mxu0 %v328
      %392 = vmatpush1.msra.mxu0 %v327
      %393 = vmatprep.subr.mxu0 %v330
      %394 = vmatpush1.msra.mxu0 %v329
      %395 = vmatprep.subr.mxu0 %v332
      %396 = vmatpush1.msra.mxu0 %v331
      %397 = vmatprep.subr.mxu0 %v334
      %398 = vmatpush1.msra.mxu0 %v333
      %399 = vmatprep.subr.mxu0 %v336
      %400 = vmatpush1.msra.mxu0 %v335
      %401 = vmatprep.subr.mxu0 %v338
      %402 = vmatpush1.msra.mxu0 %v337
      %403 = vmatprep.subr.mxu0 %v340
      %404 = vmatpush1.msra.mxu0 %v339
      %405 = vmatprep.subr.mxu0 %v342
      %406 = vmatpush1.msra.mxu0 %v341
      %407 = vmatprep.subr.mxu0 %v344
      %408 = vmatpush1.msra.mxu0 %v343
      %409 = vmatprep.subr.mxu0 %v346
      %410 = vmatpush1.msra.mxu0 %v345
      %411 = vmatprep.subr.mxu0 %v348
      %412 = vmatpush1.msra.mxu0 %v347
      %413 = vmatprep.subr.mxu0 %v350
      %414 = vmatpush1.msra.mxu0 %v349
      %415 = vmatprep.subr.mxu0 %v352
      %416 = vmatpush1.msra.mxu0 %v351
      %417 = vmatprep.subr.mxu0 %v354
      %418 = vmatpush1.msra.mxu0 %v353
      %419 = vmatprep.subr.mxu0 %v356
      %420 = vmatpush1.msra.mxu0 %v355
      %421 = vmatprep.mubr.f32.mxu0 %v133
      %422 = vmatmul.mubr.f32.gmra.mrb[0].mxu0 %v132
      %v423 = vpop.f32.mrb[0].mxu0
      %v424 = vadd.f32 0.0, %v423
      %v425 = vpop.f32.mrb[0].mxu0
      %v426 = vadd.f32 0.0, %v425
      %427 = vmatprep.mubr.f32.mxu0 %v135
      %428 = vmatmul.mubr.f32.gmra.mrb[0].mxu0 %v134
      %v429 = vpop.f32.mrb[0].mxu0
      %v430 = vadd.f32 0.0, %v429
      %v431 = vpop.f32.mrb[0].mxu0
      %v432 = vadd.f32 0.0, %v431
      %433 = vmatprep.mubr.f32.mxu0 %v137
      %434 = vmatmul.mubr.f32.gmra.mrb[0].mxu0 %v136
      %v435 = vpop.f32.mrb[0].mxu0
      %v436 = vadd.f32 0.0, %v435
      %v437 = vpop.f32.mrb[0].mxu0
      %v438 = vadd.f32 0.0, %v437
      %439 = vmatprep.mubr.f32.mxu0 %v139
      %440 = vmatmul.mubr.f32.gmra.mrb[0].mxu0 %v138
      %v441 = vpop.f32.mrb[0].mxu0
      %v442 = vadd.f32 0.0, %v441
      %v443 = vpop.f32.mrb[0].mxu0
      %v444 = vadd.f32 0.0, %v443
      %445 = vdwg.mxu0
      %v446 = vld [vmem:[#allocation10] sm:$0xff]
      %v447 = vld [vmem:[#allocation10 + $0x8] sm:$0xff]
      %v448 = vld [vmem:[#allocation10 + $0x10] sm:$0xff]
      %v449 = vld [vmem:[#allocation10 + $0x18] sm:$0xff]
      %v450 = vld [vmem:[#allocation10 + $0x20] sm:$0xff]
      %v451 = vld [vmem:[#allocation10 + $0x28] sm:$0xff]
      %v452 = vld [vmem:[#allocation10 + $0x30] sm:$0xff]
      %v453 = vld [vmem:[#allocation10 + $0x38] sm:$0xff]
      %v454 = vld [vmem:[#allocation12] sm:$0xff]
      %v455 = vld [vmem:[#allocation12 + $0x8] sm:$0xff]
      %v456 = vld [vmem:[#allocation12 + $0x10] sm:$0xff]
      %v457 = vld [vmem:[#allocation12 + $0x18] sm:$0xff]
      %v458 = vld [vmem:[#allocation12 + $0x20] sm:$0xff]
      %v459 = vld [vmem:[#allocation12 + $0x28] sm:$0xff]
      %v460 = vld [vmem:[#allocation12 + $0x30] sm:$0xff]
      %v461 = vld [vmem:[#allocation12 + $0x38] sm:$0xff]
      %v462 = vmul.f32 %v271, %v446
      %v463 = vmul.f32 %v273, %v447
      %v464 = vmul.f32 %v277, %v448
      %v465 = vmul.f32 %v279, %v449
      %v466 = vmul.f32 %v283, %v450
      %v467 = vmul.f32 %v285, %v451
      %v468 = vmul.f32 %v289, %v452
      %v469 = vmul.f32 %v291, %v453
      %v470 = vmul.f32 %v424, %v454
      %v471 = vmul.f32 %v426, %v455
      %v472 = vmul.f32 %v430, %v456
      %v473 = vmul.f32 %v432, %v457
      %v474 = vmul.f32 %v436, %v458
      %v475 = vmul.f32 %v438, %v459
      %v476 = vmul.f32 %v442, %v460
      %v477 = vmul.f32 %v444, %v461
      %v478 = vsub.f32 %v462, %v470
      %v479 = vsub.f32 %v463, %v471
      %v480 = vsub.f32 %v464, %v472
      %v481 = vsub.f32 %v465, %v473
      %v482 = vsub.f32 %v466, %v474
      %v483 = vsub.f32 %v467, %v475
      %v484 = vsub.f32 %v468, %v476
      %v485 = vsub.f32 %v469, %v477
      %486 = vst [vmem:[#allocation2] sm:$0xff] %v478
      %487 = vst [vmem:[#allocation2 + $0x8] sm:$0xff] %v479
      %488 = vst [vmem:[#allocation2 + $0x10] sm:$0xff] %v480
      %489 = vst [vmem:[#allocation2 + $0x18] sm:$0xff] %v481
      %490 = vst [vmem:[#allocation2 + $0x20] sm:$0xff] %v482
      %491 = vst [vmem:[#allocation2 + $0x28] sm:$0xff] %v483
      %492 = vst [vmem:[#allocation2 + $0x30] sm:$0xff] %v484
      %493 = vst [vmem:[#allocation2 + $0x38] sm:$0xff] %v485
      %v494 = vmul.f32 %v271, %v454
      %v495 = vmul.f32 %v273, %v455
      %v496 = vmul.f32 %v277, %v456
      %v497 = vmul.f32 %v279, %v457
      %v498 = vmul.f32 %v283, %v458
      %v499 = vmul.f32 %v285, %v459
      %v500 = vmul.f32 %v289, %v460
      %v501 = vmul.f32 %v291, %v461
      %v502 = vmul.f32 %v424, %v446
      %v503 = vmul.f32 %v426, %v447
      %v504 = vmul.f32 %v430, %v448
      %v505 = vmul.f32 %v432, %v449
      %v506 = vmul.f32 %v436, %v450
      %v507 = vmul.f32 %v438, %v451
      %v508 = vmul.f32 %v442, %v452
      %v509 = vmul.f32 %v444, %v453
      %v510 = vadd.f32 %v494, %v502
      %v511 = vadd.f32 %v495, %v503
      %v512 = vadd.f32 %v496, %v504
      %v513 = vadd.f32 %v497, %v505
      %v514 = vadd.f32 %v498, %v506
      %v515 = vadd.f32 %v499, %v507
      %v516 = vadd.f32 %v500, %v508
      %v517 = vadd.f32 %v501, %v509
      %518 = vst [vmem:[#allocation3] sm:$0xff] %v510
      %519 = vst [vmem:[#allocation3 + $0x8] sm:$0xff] %v511
      %520 = vst [vmem:[#allocation3 + $0x10] sm:$0xff] %v512
      %521 = vst [vmem:[#allocation3 + $0x18] sm:$0xff] %v513
      %522 = vst [vmem:[#allocation3 + $0x20] sm:$0xff] %v514
      %523 = vst [vmem:[#allocation3 + $0x28] sm:$0xff] %v515
      %524 = vst [vmem:[#allocation3 + $0x30] sm:$0xff] %v516
      %525 = vst [vmem:[#allocation3 + $0x38] sm:$0xff] %v517
    $region69: #{tpu_custom_call.1} parent=1 // pred_fallthru
      _
    %v526 = vld [vmem:[#allocation2] sm:$0xff]
    %v527 = vld [vmem:[#allocation2 + $0x8] sm:$0xff]
    %v528 = vld [vmem:[#allocation2 + $0x10] sm:$0xff]
    %v529 = vld [vmem:[#allocation2 + $0x18] sm:$0xff]
    %v530 = vld [vmem:[#allocation2 + $0x20] sm:$0xff]
    %v531 = vld [vmem:[#allocation2 + $0x28] sm:$0xff]
    %v532 = vld [vmem:[#allocation2 + $0x30] sm:$0xff]
    %v533 = vld [vmem:[#allocation2 + $0x38] sm:$0xff]
    %v534 = vld [vmem:[#allocation13] sm:$0xff]
    %v535 = vld [vmem:[#allocation13 + $0x8] sm:$0xff]
    %v536 = vld [vmem:[#allocation13 + $0x10] sm:$0xff]
    %v537 = vld [vmem:[#allocation13 + $0x18] sm:$0xff]
    %v538 = vld [vmem:[#allocation13 + $0x20] sm:$0xff]
    %v539 = vld [vmem:[#allocation13 + $0x28] sm:$0xff]
    %v540 = vld [vmem:[#allocation13 + $0x30] sm:$0xff]
    %v541 = vld [vmem:[#allocation13 + $0x38] sm:$0xff]
    %v542 = vld [vmem:[#allocation13 + $0x40] sm:$0xff]
    %v543 = vld [vmem:[#allocation13 + $0x48] sm:$0xff]
    %v544 = vld [vmem:[#allocation13 + $0x50] sm:$0xff]
    %v545 = vld [vmem:[#allocation13 + $0x58] sm:$0xff]
    %v546 = vld [vmem:[#allocation13 + $0x60] sm:$0xff]
    %v547 = vld [vmem:[#allocation13 + $0x68] sm:$0xff]
    %v548 = vld [vmem:[#allocation13 + $0x70] sm:$0xff]
    %v549 = vld [vmem:[#allocation13 + $0x78] sm:$0xff]
    %v550 = vld [vmem:[#allocation13 + $0x80] sm:$0xff]
    %v551 = vld [vmem:[#allocation13 + $0x88] sm:$0xff]
    %v552 = vld [vmem:[#allocation13 + $0x90] sm:$0xff]
    %v553 = vld [vmem:[#allocation13 + $0x98] sm:$0xff]
    %v554 = vld [vmem:[#allocation13 + $0xa0] sm:$0xff]
    %v555 = vld [vmem:[#allocation13 + $0xa8] sm:$0xff]
    %v556 = vld [vmem:[#allocation13 + $0xb0] sm:$0xff]
    %v557 = vld [vmem:[#allocation13 + $0xb8] sm:$0xff]
    %v558 = vld [vmem:[#allocation13 + $0xc0] sm:$0xff]
    %v559 = vld [vmem:[#allocation13 + $0xc8] sm:$0xff]
    %v560 = vld [vmem:[#allocation13 + $0xd0] sm:$0xff]
    %v561 = vld [vmem:[#allocation13 + $0xd8] sm:$0xff]
    %v562 = vld [vmem:[#allocation13 + $0xe0] sm:$0xff]
    %v563 = vld [vmem:[#allocation13 + $0xe8] sm:$0xff]
    %v564 = vld [vmem:[#allocation13 + $0xf0] sm:$0xff]
    %v565 = vld [vmem:[#allocation13 + $0xf8] sm:$0xff]
    %v566 = vld [vmem:[#allocation13 + $0x100] sm:$0xff]
    %v567 = vld [vmem:[#allocation13 + $0x108] sm:$0xff]
    %v568 = vld [vmem:[#allocation13 + $0x110] sm:$0xff]
    %v569 = vld [vmem:[#allocation13 + $0x118] sm:$0xff]
    %v570 = vld [vmem:[#allocation13 + $0x120] sm:$0xff]
    %v571 = vld [vmem:[#allocation13 + $0x128] sm:$0xff]
    %v572 = vld [vmem:[#allocation13 + $0x130] sm:$0xff]
    %v573 = vld [vmem:[#allocation13 + $0x138] sm:$0xff]
    %v574 = vld [vmem:[#allocation13 + $0x140] sm:$0xff]
    %v575 = vld [vmem:[#allocation13 + $0x148] sm:$0xff]
    %v576 = vld [vmem:[#allocation13 + $0x150] sm:$0xff]
    %v577 = vld [vmem:[#allocation13 + $0x158] sm:$0xff]
    %v578 = vld [vmem:[#allocation13 + $0x160] sm:$0xff]
    %v579 = vld [vmem:[#allocation13 + $0x168] sm:$0xff]
    %v580 = vld [vmem:[#allocation13 + $0x170] sm:$0xff]
    %v581 = vld [vmem:[#allocation13 + $0x178] sm:$0xff]
    %v582 = vld [vmem:[#allocation13 + $0x180] sm:$0xff]
    %v583 = vld [vmem:[#allocation13 + $0x188] sm:$0xff]
    %v584 = vld [vmem:[#allocation13 + $0x190] sm:$0xff]
    %v585 = vld [vmem:[#allocation13 + $0x198] sm:$0xff]
    %v586 = vld [vmem:[#allocation13 + $0x1a0] sm:$0xff]
    %v587 = vld [vmem:[#allocation13 + $0x1a8] sm:$0xff]
    %v588 = vld [vmem:[#allocation13 + $0x1b0] sm:$0xff]
    %v589 = vld [vmem:[#allocation13 + $0x1b8] sm:$0xff]
    %v590 = vld [vmem:[#allocation13 + $0x1c0] sm:$0xff]
    %v591 = vld [vmem:[#allocation13 + $0x1c8] sm:$0xff]
    %v592 = vld [vmem:[#allocation13 + $0x1d0] sm:$0xff]
    %v593 = vld [vmem:[#allocation13 + $0x1d8] sm:$0xff]
    %v594 = vld [vmem:[#allocation13 + $0x1e0] sm:$0xff]
    %v595 = vld [vmem:[#allocation13 + $0x1e8] sm:$0xff]
    %v596 = vld [vmem:[#allocation13 + $0x1f0] sm:$0xff]
    %v597 = vld [vmem:[#allocation13 + $0x1f8] sm:$0xff]
    %v598 = vld [vmem:[#allocation3] sm:$0xff]
    %v599 = vld [vmem:[#allocation3 + $0x8] sm:$0xff]
    %v600 = vld [vmem:[#allocation3 + $0x10] sm:$0xff]
    %v601 = vld [vmem:[#allocation3 + $0x18] sm:$0xff]
    %v602 = vld [vmem:[#allocation3 + $0x20] sm:$0xff]
    %v603 = vld [vmem:[#allocation3 + $0x28] sm:$0xff]
    %v604 = vld [vmem:[#allocation3 + $0x30] sm:$0xff]
    %v605 = vld [vmem:[#allocation3 + $0x38] sm:$0xff]
    %v606 = vld [vmem:[#allocation15] sm:$0xff]
    %v607 = vld [vmem:[#allocation15 + $0x8] sm:$0xff]
    %v608 = vld [vmem:[#allocation15 + $0x10] sm:$0xff]
    %v609 = vld [vmem:[#allocation15 + $0x18] sm:$0xff]
    %v610 = vld [vmem:[#allocation15 + $0x20] sm:$0xff]
    %v611 = vld [vmem:[#allocation15 + $0x28] sm:$0xff]
    %v612 = vld [vmem:[#allocation15 + $0x30] sm:$0xff]
    %v613 = vld [vmem:[#allocation15 + $0x38] sm:$0xff]
    %v614 = vld [vmem:[#allocation15 + $0x40] sm:$0xff]
    %v615 = vld [vmem:[#allocation15 + $0x48] sm:$0xff]
    %v616 = vld [vmem:[#allocation15 + $0x50] sm:$0xff]
    %v617 = vld [vmem:[#allocation15 + $0x58] sm:$0xff]
    %v618 = vld [vmem:[#allocation15 + $0x60] sm:$0xff]
    %v619 = vld [vmem:[#allocation15 + $0x68] sm:$0xff]
    %v620 = vld [vmem:[#allocation15 + $0x70] sm:$0xff]
    %v621 = vld [vmem:[#allocation15 + $0x78] sm:$0xff]
    %v622 = vld [vmem:[#allocation15 + $0x80] sm:$0xff]
    %v623 = vld [vmem:[#allocation15 + $0x88] sm:$0xff]
    %v624 = vld [vmem:[#allocation15 + $0x90] sm:$0xff]
    %v625 = vld [vmem:[#allocation15 + $0x98] sm:$0xff]
    %v626 = vld [vmem:[#allocation15 + $0xa0] sm:$0xff]
    %v627 = vld [vmem:[#allocation15 + $0xa8] sm:$0xff]
    %v628 = vld [vmem:[#allocation15 + $0xb0] sm:$0xff]
    %v629 = vld [vmem:[#allocation15 + $0xb8] sm:$0xff]
    %v630 = vld [vmem:[#allocation15 + $0xc0] sm:$0xff]
    %v631 = vld [vmem:[#allocation15 + $0xc8] sm:$0xff]
    %v632 = vld [vmem:[#allocation15 + $0xd0] sm:$0xff]
    %v633 = vld [vmem:[#allocation15 + $0xd8] sm:$0xff]
    %v634 = vld [vmem:[#allocation15 + $0xe0] sm:$0xff]
    %v635 = vld [vmem:[#allocation15 + $0xe8] sm:$0xff]
    %v636 = vld [vmem:[#allocation15 + $0xf0] sm:$0xff]
    %v637 = vld [vmem:[#allocation15 + $0xf8] sm:$0xff]
    %v638 = vld [vmem:[#allocation15 + $0x100] sm:$0xff]
    %v639 = vld [vmem:[#allocation15 + $0x108] sm:$0xff]
    %v640 = vld [vmem:[#allocation15 + $0x110] sm:$0xff]
    %v641 = vld [vmem:[#allocation15 + $0x118] sm:$0xff]
    %v642 = vld [vmem:[#allocation15 + $0x120] sm:$0xff]
    %v643 = vld [vmem:[#allocation15 + $0x128] sm:$0xff]
    %v644 = vld [vmem:[#allocation15 + $0x130] sm:$0xff]
    %v645 = vld [vmem:[#allocation15 + $0x138] sm:$0xff]
    %v646 = vld [vmem:[#allocation15 + $0x140] sm:$0xff]
    %v647 = vld [vmem:[#allocation15 + $0x148] sm:$0xff]
    %v648 = vld [vmem:[#allocation15 + $0x150] sm:$0xff]
    %v649 = vld [vmem:[#allocation15 + $0x158] sm:$0xff]
    %v650 = vld [vmem:[#allocation15 + $0x160] sm:$0xff]
    %v651 = vld [vmem:[#allocation15 + $0x168] sm:$0xff]
    %v652 = vld [vmem:[#allocation15 + $0x170] sm:$0xff]
    %v653 = vld [vmem:[#allocation15 + $0x178] sm:$0xff]
    %v654 = vld [vmem:[#allocation15 + $0x180] sm:$0xff]
    %v655 = vld [vmem:[#allocation15 + $0x188] sm:$0xff]
    %v656 = vld [vmem:[#allocation15 + $0x190] sm:$0xff]
    %v657 = vld [vmem:[#allocation15 + $0x198] sm:$0xff]
    %v658 = vld [vmem:[#allocation15 + $0x1a0] sm:$0xff]
    %v659 = vld [vmem:[#allocation15 + $0x1a8] sm:$0xff]
    %v660 = vld [vmem:[#allocation15 + $0x1b0] sm:$0xff]
    %v661 = vld [vmem:[#allocation15 + $0x1b8] sm:$0xff]
    %v662 = vld [vmem:[#allocation15 + $0x1c0] sm:$0xff]
    %v663 = vld [vmem:[#allocation15 + $0x1c8] sm:$0xff]
    %v664 = vld [vmem:[#allocation15 + $0x1d0] sm:$0xff]
    %v665 = vld [vmem:[#allocation15 + $0x1d8] sm:$0xff]
    %v666 = vld [vmem:[#allocation15 + $0x1e0] sm:$0xff]
    %v667 = vld [vmem:[#allocation15 + $0x1e8] sm:$0xff]
    %v668 = vld [vmem:[#allocation15 + $0x1f0] sm:$0xff]
    %v669 = vld [vmem:[#allocation15 + $0x1f8] sm:$0xff]
    %670 = vmatprep.subr.mxu0 %v607
    %671 = vmatpush1.msra.mxu0 %v606
    %672 = vmatprep.subr.mxu0 %v609
    %673 = vmatpush1.msra.mxu0 %v608
    %674 = vmatprep.subr.mxu0 %v611
    %675 = vmatpush1.msra.mxu0 %v610
    %676 = vmatprep.subr.mxu0 %v613
    %677 = vmatpush1.msra.mxu0 %v612
    %678 = vmatprep.subr.mxu0 %v615
    %679 = vmatpush1.msra.mxu0 %v614
    %680 = vmatprep.subr.mxu0 %v617
    %681 = vmatpush1.msra.mxu0 %v616
    %682 = vmatprep.subr.mxu0 %v619
    %683 = vmatpush1.msra.mxu0 %v618
    %684 = vmatprep.subr.mxu0 %v621
    %685 = vmatpush1.msra.mxu0 %v620
    %686 = vmatprep.subr.mxu0 %v623
    %687 = vmatpush1.msra.mxu0 %v622
    %688 = vmatprep.subr.mxu0 %v625
    %689 = vmatpush1.msra.mxu0 %v624
    %690 = vmatprep.subr.mxu0 %v627
    %691 = vmatpush1.msra.mxu0 %v626
    %692 = vmatprep.subr.mxu0 %v629
    %693 = vmatpush1.msra.mxu0 %v628
    %694 = vmatprep.subr.mxu0 %v631
    %695 = vmatpush1.msra.mxu0 %v630
    %696 = vmatprep.subr.mxu0 %v633
    %697 = vmatpush1.msra.mxu0 %v632
    %698 = vmatprep.subr.mxu0 %v635
    %699 = vmatpush1.msra.mxu0 %v634
    %700 = vmatprep.subr.mxu0 %v637
    %701 = vmatpush1.msra.mxu0 %v636
    %702 = vmatprep.subr.mxu0 %v639
    %703 = vmatpush1.msra.mxu0 %v638
    %704 = vmatprep.subr.mxu0 %v641
    %705 = vmatpush1.msra.mxu0 %v640
    %706 = vmatprep.subr.mxu0 %v643
    %707 = vmatpush1.msra.mxu0 %v642
    %708 = vmatprep.subr.mxu0 %v645
    %709 = vmatpush1.msra.mxu0 %v644
    %710 = vmatprep.subr.mxu0 %v647
    %711 = vmatpush1.msra.mxu0 %v646
    %712 = vmatprep.subr.mxu0 %v649
    %713 = vmatpush1.msra.mxu0 %v648
    %714 = vmatprep.subr.mxu0 %v651
    %715 = vmatpush1.msra.mxu0 %v650
    %716 = vmatprep.subr.mxu0 %v653
    %717 = vmatpush1.msra.mxu0 %v652
    %718 = vmatprep.subr.mxu0 %v655
    %719 = vmatpush1.msra.mxu0 %v654
    %720 = vmatprep.subr.mxu0 %v657
    %721 = vmatpush1.msra.mxu0 %v656
    %722 = vmatprep.subr.mxu0 %v659
    %723 = vmatpush1.msra.mxu0 %v658
    %724 = vmatprep.subr.mxu0 %v661
    %725 = vmatpush1.msra.mxu0 %v660
    %726 = vmatprep.subr.mxu0 %v663
    %727 = vmatpush1.msra.mxu0 %v662
    %728 = vmatprep.subr.mxu0 %v665
    %729 = vmatpush1.msra.mxu0 %v664
    %730 = vmatprep.subr.mxu0 %v667
    %731 = vmatpush1.msra.mxu0 %v666
    %732 = vmatprep.subr.mxu0 %v669
    %733 = vmatpush1.msra.mxu0 %v668
    %734 = vmatprep.mubr.f32.mxu0 %v599
    %735 = vmatmul.mubr.f32.gmra.mrb[0].mxu0 %v598
    %v736 = vpop.f32.mrb[0].mxu0
    %v737 = vadd.f32 0.0, %v736
    %v738 = vpop.f32.mrb[0].mxu0
    %v739 = vadd.f32 0.0, %v738
    %740 = vmatprep.mubr.f32.mxu0 %v601
    %741 = vmatmul.mubr.f32.gmra.mrb[0].mxu0 %v600
    %v742 = vpop.f32.mrb[0].mxu0
    %v743 = vadd.f32 0.0, %v742
    %v744 = vpop.f32.mrb[0].mxu0
    %v745 = vadd.f32 0.0, %v744
    %746 = vmatprep.mubr.f32.mxu0 %v603
    %747 = vmatmul.mubr.f32.gmra.mrb[0].mxu0 %v602
    %v748 = vpop.f32.mrb[0].mxu0
    %v749 = vadd.f32 0.0, %v748
    %v750 = vpop.f32.mrb[0].mxu0
    %v751 = vadd.f32 0.0, %v750
    %752 = vmatprep.mubr.f32.mxu0 %v605
    %753 = vmatmul.mubr.f32.gmra.mrb[0].mxu0 %v604
    %v754 = vpop.f32.mrb[0].mxu0
    %v755 = vadd.f32 0.0, %v754
    %v756 = vpop.f32.mrb[0].mxu0
    %v757 = vadd.f32 0.0, %v756
    %758 = vdwg.mxu0
    %759 = vmatprep.subr.mxu0 %v535
    %760 = vmatpush1.msra.mxu0 %v534
    %761 = vmatprep.subr.mxu0 %v537
    %762 = vmatpush1.msra.mxu0 %v536
    %763 = vmatprep.subr.mxu0 %v539
    %764 = vmatpush1.msra.mxu0 %v538
    %765 = vmatprep.subr.mxu0 %v541
    %766 = vmatpush1.msra.mxu0 %v540
    %767 = vmatprep.subr.mxu0 %v543
    %768 = vmatpush1.msra.mxu0 %v542
    %769 = vmatprep.subr.mxu0 %v545
    %770 = vmatpush1.msra.mxu0 %v544
    %771 = vmatprep.subr.mxu0 %v547
    %772 = vmatpush1.msra.mxu0 %v546
    %773 = vmatprep.subr.mxu0 %v549
    %774 = vmatpush1.msra.mxu0 %v548
    %775 = vmatprep.subr.mxu0 %v551
    %776 = vmatpush1.msra.mxu0 %v550
    %777 = vmatprep.subr.mxu0 %v553
    %778 = vmatpush1.msra.mxu0 %v552
    %779 = vmatprep.subr.mxu0 %v555
    %780 = vmatpush1.msra.mxu0 %v554
    %781 = vmatprep.subr.mxu0 %v557
    %782 = vmatpush1.msra.mxu0 %v556
    %783 = vmatprep.subr.mxu0 %v559
    %784 = vmatpush1.msra.mxu0 %v558
    %785 = vmatprep.subr.mxu0 %v561
    %786 = vmatpush1.msra.mxu0 %v560
    %787 = vmatprep.subr.mxu0 %v563
    %788 = vmatpush1.msra.mxu0 %v562
    %789 = vmatprep.subr.mxu0 %v565
    %790 = vmatpush1.msra.mxu0 %v564
    %791 = vmatprep.subr.mxu0 %v567
    %792 = vmatpush1.msra.mxu0 %v566
    %793 = vmatprep.subr.mxu0 %v569
    %794 = vmatpush1.msra.mxu0 %v568
    %795 = vmatprep.subr.mxu0 %v571
    %796 = vmatpush1.msra.mxu0 %v570
    %797 = vmatprep.subr.mxu0 %v573
    %798 = vmatpush1.msra.mxu0 %v572
    %799 = vmatprep.subr.mxu0 %v575
    %800 = vmatpush1.msra.mxu0 %v574
    %801 = vmatprep.subr.mxu0 %v577
    %802 = vmatpush1.msra.mxu0 %v576
    %803 = vmatprep.subr.mxu0 %v579
    %804 = vmatpush1.msra.mxu0 %v578
    %805 = vmatprep.subr.mxu0 %v581
    %806 = vmatpush1.msra.mxu0 %v580
    %807 = vmatprep.subr.mxu0 %v583
    %808 = vmatpush1.msra.mxu0 %v582
    %809 = vmatprep.subr.mxu0 %v585
    %810 = vmatpush1.msra.mxu0 %v584
    %811 = vmatprep.subr.mxu0 %v587
    %812 = vmatpush1.msra.mxu0 %v586
    %813 = vmatprep.subr.mxu0 %v589
    %814 = vmatpush1.msra.mxu0 %v588
    %815 = vmatprep.subr.mxu0 %v591
    %816 = vmatpush1.msra.mxu0 %v590
    %817 = vmatprep.subr.mxu0 %v593
    %818 = vmatpush1.msra.mxu0 %v592
    %819 = vmatprep.subr.mxu0 %v595
    %820 = vmatpush1.msra.mxu0 %v594
    %821 = vmatprep.subr.mxu0 %v597
    %822 = vmatpush1.msra.mxu0 %v596
    %823 = vmatprep.mubr.f32.mxu0 %v527
    %824 = vmatmul.mubr.f32.gmra.mrb[0].mxu0 %v526
    %v825 = vpop.f32.mrb[0].mxu0
    %v826 = vadd.f32 %v737, %v825
    %v827 = vpop.f32.mrb[0].mxu0
    %v828 = vadd.f32 %v739, %v827
    %829 = vmatprep.mubr.f32.mxu0 %v529
    %830 = vmatmul.mubr.f32.gmra.mrb[0].mxu0 %v528
    %v831 = vpop.f32.mrb[0].mxu0
    %v832 = vadd.f32 %v743, %v831
    %v833 = vpop.f32.mrb[0].mxu0
    %v834 = vadd.f32 %v745, %v833
    %835 = vmatprep.mubr.f32.mxu0 %v531
    %836 = vmatmul.mubr.f32.gmra.mrb[0].mxu0 %v530
    %v837 = vpop.f32.mrb[0].mxu0
    %v838 = vadd.f32 %v749, %v837
    %v839 = vpop.f32.mrb[0].mxu0
    %v840 = vadd.f32 %v751, %v839
    %841 = vmatprep.mubr.f32.mxu0 %v533
    %842 = vmatmul.mubr.f32.gmra.mrb[0].mxu0 %v532
    %v843 = vpop.f32.mrb[0].mxu0
    %v844 = vadd.f32 %v755, %v843
    %v845 = vpop.f32.mrb[0].mxu0
    %v846 = vadd.f32 %v757, %v845
    %847 = vdwg.mxu0
    %v848 = vadd.f32 %v826, %v832
    %v849 = vrot.slane %v848, 4
    %v850 = vadd.f32 %v848, %v849
    %v851 = vrot.slane %v850, 2
    %v852 = vadd.f32 %v850, %v851
    %v853 = vrot.slane %v852, 1
    %v854 = vadd.f32 %v852, %v853
    %v855 = vadd.f32 %v828, %v834
    %v856 = vrot.slane %v855, 4
    %v857 = vadd.f32 %v855, %v856
    %v858 = vrot.slane %v857, 2
    %v859 = vadd.f32 %v857, %v858
    %v860 = vrot.slane %v859, 1
    %v861 = vadd.f32 %v859, %v860
    %v862 = vadd.f32 %v838, %v844
    %v863 = vrot.slane %v862, 4
    %v864 = vadd.f32 %v862, %v863
    %v865 = vrot.slane %v864, 2
    %v866 = vadd.f32 %v864, %v865
    %v867 = vrot.slane %v866, 1
    %v868 = vadd.f32 %v866, %v867
    %v869 = vadd.f32 %v840, %v846
    %v870 = vrot.slane %v869, 4
    %v871 = vadd.f32 %v869, %v870
    %v872 = vrot.slane %v871, 2
    %v873 = vadd.f32 %v871, %v872
    %v874 = vrot.slane %v873, 1
    %v875 = vadd.f32 %v873, %v874
    %v876 = vrcp.pop 16.0
    %v877 = vmul.f32 %v854, %v876
    %v878 = vmul.f32 %v861, %v876
    %v879 = vmul.f32 %v868, %v876
    %v880 = vmul.f32 %v875, %v876
    %v881 = vmul.f32 %v826, %v826
    %v882 = vmul.f32 %v828, %v828
    %v883 = vmul.f32 %v832, %v832
    %v884 = vmul.f32 %v834, %v834
    %v885 = vmul.f32 %v838, %v838
    %v886 = vmul.f32 %v840, %v840
    %v887 = vmul.f32 %v844, %v844
    %v888 = vmul.f32 %v846, %v846
    %v889 = vadd.f32 %v881, %v883
    %v890 = vrot.slane %v889, 4
    %v891 = vadd.f32 %v889, %v890
    %v892 = vrot.slane %v891, 2
    %v893 = vadd.f32 %v891, %v892
    %v894 = vrot.slane %v893, 1
    %v895 = vadd.f32 %v893, %v894
    %v896 = vadd.f32 %v882, %v884
    %v897 = vrot.slane %v896, 4
    %v898 = vadd.f32 %v896, %v897
    %v899 = vrot.slane %v898, 2
    %v900 = vadd.f32 %v898, %v899
    %v901 = vrot.slane %v900, 1
    %v902 = vadd.f32 %v900, %v901
    %v903 = vadd.f32 %v885, %v887
    %v904 = vrot.slane %v903, 4
    %v905 = vadd.f32 %v903, %v904
    %v906 = vrot.slane %v905, 2
    %v907 = vadd.f32 %v905, %v906
    %v908 = vrot.slane %v907, 1
    %v909 = vadd.f32 %v907, %v908
    %v910 = vadd.f32 %v886, %v888
    %v911 = vrot.slane %v910, 4
    %v912 = vadd.f32 %v910, %v911
    %v913 = vrot.slane %v912, 2
    %v914 = vadd.f32 %v912, %v913
    %v915 = vrot.slane %v914, 1
    %v916 = vadd.f32 %v914, %v915
    %v917 = vmul.f32 %v895, %v876
    %v918 = vmul.f32 %v902, %v876
    %v919 = vmul.f32 %v909, %v876
    %v920 = vmul.f32 %v916, %v876
    %v921 = vmul.f32 %v877, %v877
    %v922 = vmul.f32 %v878, %v878
    %v923 = vmul.f32 %v879, %v879
    %v924 = vmul.f32 %v880, %v880
    %v925 = vsub.f32 %v917, %v921
    %v926 = vsub.f32 %v918, %v922
    %v927 = vsub.f32 %v919, %v923
    %v928 = vsub.f32 %v920, %v924
    %v929 = vadd.f32 %v925, 1e-05
    %v930 = vadd.f32 %v926, 1e-05
    %v931 = vadd.f32 %v927, 1e-05
    %v932 = vadd.f32 %v928, 1e-05
    %v933 = vrsqrt.pop %v929
    %v934 = vrsqrt.pop %v930
    %v935 = vrsqrt.pop %v931
    %v936 = vrsqrt.pop %v932
    %v937 = vsub.f32 %v826, %v877
    %v938 = vsub.f32 %v828, %v878
    %v939 = vsub.f32 %v832, %v877
    %v940 = vsub.f32 %v834, %v878
    %v941 = vsub.f32 %v838, %v879
    %v942 = vsub.f32 %v840, %v880
    %v943 = vsub.f32 %v844, %v879
    %v944 = vsub.f32 %v846, %v880
    %v945 = vmul.f32 %v937, %v933
    %v946 = vmul.f32 %v938, %v934
    %v947 = vmul.f32 %v939, %v933
    %v948 = vmul.f32 %v940, %v934
    %v949 = vmul.f32 %v941, %v935
    %v950 = vmul.f32 %v942, %v936
    %v951 = vmul.f32 %v943, %v935
    %v952 = vmul.f32 %v944, %v936
    %v953 = vld [vmem:[%s7] sm:$0xff]
    %v954 = vld [vmem:[%s7 + $0x8] sm:$0xff]
    %956 = vset.pattern.permute.xlu0 0
    %957 = vperm.xlu0 %956, %v953
    %v958 = vpop.permute.xlu0 %957
    %961 = vset.pattern.permute.xlu0 0
    %962 = vperm.xlu0 %961, %v954
    %v963 = vpop.permute.xlu0 %962
    %v965 = vmul.f32 %v945, %v958
    %v966 = vmul.f32 %v946, %v958
    %v967 = vmul.f32 %v947, %v963
    %v968 = vmul.f32 %v948, %v963
    %v969 = vmul.f32 %v949, %v958
    %v970 = vmul.f32 %v950, %v958
    %v971 = vmul.f32 %v951, %v963
    %v972 = vmul.f32 %v952, %v963
    %v973 = vld [vmem:[%s8] sm:$0xff]
    %v974 = vld [vmem:[%s8 + $0x8] sm:$0xff]
    %976 = vset.pattern.permute.xlu0 0
    %977 = vperm.xlu0 %976, %v973
    %v978 = vpop.permute.xlu0 %977
    %981 = vset.pattern.permute.xlu0 0
    %982 = vperm.xlu0 %981, %v974
    %v983 = vpop.permute.xlu0 %982
    %v985 = vadd.f32 %v965, %v978
    %v986 = vadd.f32 %v966, %v978
    %v987 = vadd.f32 %v967, %v983
    %v988 = vadd.f32 %v968, %v983
    %v989 = vadd.f32 %v969, %v978
    %v990 = vadd.f32 %v970, %v978
    %v991 = vadd.f32 %v971, %v983
    %v992 = vadd.f32 %v972, %v983
    %993 = vst [vmem:[#allocation16] sm:$0xff] %v985
    %994 = vst [vmem:[#allocation16 + $0x8] sm:$0xff] %v986
    %995 = vst [vmem:[#allocation16 + $0x10] sm:$0xff] %v987
    %996 = vst [vmem:[#allocation16 + $0x18] sm:$0xff] %v988
    %997 = vst [vmem:[#allocation16 + $0x20] sm:$0xff] %v989
    %998 = vst [vmem:[#allocation16 + $0x28] sm:$0xff] %v990
    %999 = vst [vmem:[#allocation16 + $0x30] sm:$0xff] %v991
    %1000 = vst [vmem:[#allocation16 + $0x38] sm:$0xff] %v992
    // Predicated region
    $region70: #{tpu_custom_call.1} parent=1 // pred_check
      _
    $region71: #{tpu_custom_call.1} parent=1 // pred_check_branch
      %1002 = sbr.rel (0) target = $region73
    $region72: #{tpu_custom_call.1} parent=1 // pred_region
      %s1004 = ssub.s32 1024, 1024
      %1005 = vsyncadd [#allocation6], %s1004
      %s1006 = sshll.u32 [#allocation16], 4
      %s1007 = int_to_ptr.vmem [resolvable:$true] %s1006
      %1012 = dma.vmem_to_hbm [thread:$0]  %s1007, 1024, %s9, [#allocation6], 256, 256, 16
    $region73: #{tpu_custom_call.1} parent=1 // pred_fallthru
      _
    // Predicated region
    $region74: #{tpu_custom_call.1} parent=1 // pred_check
      _
    $region75: #{tpu_custom_call.1} parent=1 // pred_check_branch
      %1014 = sbr.rel (0) target = $region77
    $region76: #{tpu_custom_call.1} parent=1 // pred_region
      %1015 = dma.done [#allocation6], 1024
    $region77: #{tpu_custom_call.1} parent=1 // pred_fallthru
      _
    %1016 = vsyncpa [#allocation5], 1
    %1017 = vsyncpa [#allocation8], 1
    %1018 = vsyncpa [#allocation11], 1
    %1019 = vsyncpa [#allocation14], 1
    %1020 = vsyncpa [#allocation6], 1

</llo_original>
